<compile_context>
chip_gen: v5e
topology: v5e:2x2
jax: 0.10.0
libtpu: 0.0.40
codegen_flags: <defaults>
</compile_context>

<pallas_src>
import jax
import jax.numpy as jnp
from jax.experimental import pallas as pl
from jax.experimental.pallas import tpu as pltpu


HIDDEN = 256
BLOCK_B = 512  # batch-tile rows when the flattened batch is large


def _q_mlp_kernel(s_ref, a_ref, w1s_ref, w1a_ref, b1_ref, w2_ref, b2_ref,
                  w3_ref, b3_ref, o_ref):
    # fc1 over the virtual concat(s, a):  x @ W1 == s @ W1[:S] + a @ W1[S:]
    # Cast activations to bf16 in-kernel (cheap VPU cast, native bf16 MXU rate),
    # accumulate in f32.
    s_bf = s_ref[...].astype(jnp.bfloat16)
    a_bf = a_ref[...].astype(jnp.bfloat16)
    h1 = (jnp.dot(s_bf, w1s_ref[...], preferred_element_type=jnp.float32)
          + jnp.dot(a_bf, w1a_ref[...], preferred_element_type=jnp.float32)
          + b1_ref[...])
    h1 = jnp.maximum(h1, 0.0)                                   # (TB, 256) f32

    h2 = jnp.dot(h1.astype(jnp.bfloat16), w2_ref[...],
                 preferred_element_type=jnp.float32) + b2_ref[...]
    h2 = jnp.maximum(h2, 0.0)                                   # (TB, 256) f32

    # fc3 (256 -> 1): an N=1 MXU matmul would use 1/128 of the output lanes;
    # do it as a VPU multiply + lane reduce (XLU has slack here).
    q = jnp.sum(h2 * w3_ref[...], axis=-1, keepdims=True) + b3_ref[0, 0]
    o_ref[...] = q.astype(o_ref.dtype)                          # (TB, 1)


def q_forward(s, a, params, *, state_dim, action_dim, block_b=BLOCK_B):
    """Pallas forward for Q(s, a). Reshape is metadata-only; the concat is folded
    into a split fc1 inside the kernel (no extra HBM pass over activations)."""
    s2 = s.reshape(-1, state_dim).astype(jnp.float32)
    a2 = a.reshape(-1, action_dim).astype(jnp.float32)
    B = s2.shape[0]

    w1s, w1a, b1, w2, b2, w3, b3 = params

    # Batch tile: whole-batch block for small B, otherwise tiles of `block_b` rows
    # so the x prefetch overlaps MXU work and per-step VMEM stays bounded.
    tb = B if B <= block_b else block_b
    grid = (pl.cdiv(B, tb),)

    batch_map = lambda i: (i, 0)
    const_map = lambda i: (0, 0)   # weights stay VMEM-resident across grid steps

    return pl.pallas_call(
        _q_mlp_kernel,
        out_shape=jax.ShapeDtypeStruct((B, 1), jnp.float32),
        grid=grid,
        in_specs=[
            pl.BlockSpec((tb, state_dim), batch_map),           # s tile (f32)
            pl.BlockSpec((tb, action_dim), batch_map),          # a tile (f32)
            pl.BlockSpec(w1s.shape, const_map),                 # W1[:S]   bf16
            pl.BlockSpec(w1a.shape, const_map),                 # W1[S:]   bf16
            pl.BlockSpec(b1.shape, const_map),                  # b1 (1,256) f32
            pl.BlockSpec(w2.shape, const_map),                  # W2       bf16
            pl.BlockSpec(b2.shape, const_map),                  # b2 (1,256) f32
            pl.BlockSpec(w3.shape, const_map),                  # W3 row (1,256) f32
            pl.BlockSpec(memory_space=pltpu.MemorySpace.SMEM),  # b3 scalar (1,1)
        ],
        out_specs=pl.BlockSpec((tb, 1), batch_map),
        compiler_params=pltpu.CompilerParams(
            dimension_semantics=("parallel",)),                 # v7x: use both TCs
    )(s2, a2, w1s, w1a, b1, w2, b2, w3, b3)


def init_q_params(key, state_dim, action_dim):
    """Deterministic init mirroring torch.nn.Linear default (U[-1/sqrt(fan_in), +]),
    stored in the kernel's layout (split fc1, bf16 matmul weights, f32 biases)."""
    in_dim = state_dim + action_dim
    k1, k2, k3, k4, k5, k6 = jax.random.split(key, 6)

    def lin(kw, kb, fan_in, fan_out):
        bound = 1.0 / jnp.sqrt(jnp.float32(fan_in))
        w = jax.random.uniform(kw, (fan_in, fan_out), jnp.float32, -bound, bound)
        b = jax.random.uniform(kb, (1, fan_out), jnp.float32, -bound, bound)
        return w, b

    w1, b1 = lin(k1, k2, in_dim, HIDDEN)
    w2, b2 = lin(k3, k4, HIDDEN, HIDDEN)
    w3, b3 = lin(k5, k6, HIDDEN, 1)

    w1s = w1[:state_dim].astype(jnp.bfloat16)        # (S, 256)
    w1a = w1[state_dim:].astype(jnp.bfloat16)        # (A, 256)
    w2b = w2.astype(jnp.bfloat16)                    # (256, 256)
    w3r = w3.reshape(1, HIDDEN)                      # (1, 256) row for VPU reduce
    b3s = b3.reshape(1, 1)                           # (1, 1) scalar -> SMEM
    return (w1s, w1a, b1, w2b, b2, w3r, b3s)


def q_reference(s, a, params, *, state_dim, action_dim):
    """Pure-JAX reference mirroring the kernel's dtype flow (bf16 inputs, f32 accum)."""
    w1s, w1a, b1, w2, b2, w3, b3 = params
    s2 = s.reshape(-1, state_dim).astype(jnp.bfloat16).astype(jnp.float32)
    a2 = a.reshape(-1, action_dim).astype(jnp.bfloat16).astype(jnp.float32)
    h1 = jnp.maximum(
        s2 @ w1s.astype(jnp.float32) + a2 @ w1a.astype(jnp.float32) + b1, 0.0)
    h1 = h1.astype(jnp.bfloat16).astype(jnp.float32)
    h2 = jnp.maximum(h1 @ w2.astype(jnp.float32) + b2, 0.0)
    return jnp.sum(h2 * w3, axis=-1, keepdims=True) + b3[0, 0]


if __name__ == "__main__":
    STATE_DIM = 16
    ACTION_DIM = 8
    BATCH = 2
    AGENTS = 4  # leading dims flatten via reshape(-1, dim), as in the torch module

    key = jax.random.PRNGKey(0)
    kp, ks, ka = jax.random.split(key, 3)

    params = init_q_params(kp, STATE_DIM, ACTION_DIM)
    s = jax.random.normal(ks, (BATCH, AGENTS, STATE_DIM), jnp.float32)
    a = jax.random.normal(ka, (BATCH, AGENTS, ACTION_DIM), jnp.float32)

    out = q_forward(s, a, params, state_dim=STATE_DIM, action_dim=ACTION_DIM)
    out = jax.block_until_ready(out)

    ref = q_reference(s, a, params, state_dim=STATE_DIM, action_dim=ACTION_DIM)
    assert out.shape == (BATCH * AGENTS, 1), out.shape
    assert jnp.allclose(out, ref, atol=1e-3, rtol=1e-3), "mismatch vs reference"

    print("KERNEL_OK")
</pallas_src>

<mosaic_0001>
module attributes {stable_mosaic.version = 11 : i64} {
  func.func @_q_mlp_kernel(%arg0: i32, %arg1: memref<8x16xf32, #tpu.memory_space<vmem>>, %arg2: memref<8x8xf32, #tpu.memory_space<vmem>>, %arg3: memref<16x256xbf16, #tpu.memory_space<vmem>>, %arg4: memref<8x256xbf16, #tpu.memory_space<vmem>>, %arg5: memref<1x256xf32, #tpu.memory_space<vmem>>, %arg6: memref<256x256xbf16, #tpu.memory_space<vmem>>, %arg7: memref<1x256xf32, #tpu.memory_space<vmem>>, %arg8: memref<1x256xf32, #tpu.memory_space<vmem>>, %arg9: memref<1x1xf32, #tpu.memory_space<smem>>, %arg10: memref<8x1xf32, #tpu.memory_space<vmem>>) attributes {dimension_semantics = [#tpu.dimension_semantics<parallel>], iteration_bounds = array<i64: 1>, scalar_prefetch = 0 : i64, scratch_operands = 0 : i64, tpu.core_type = #tpu.core_type<tc>, window_params = [{transform_indices = @transform_0, window_bounds = array<i64: 8, 16>}, {transform_indices = @transform_1, window_bounds = array<i64: 8, 8>}, {pipeline_mode = #tpu.pipeline_mode<synchronous>, transform_indices = @transform_2, window_bounds = array<i64: 16, 256>}, {pipeline_mode = #tpu.pipeline_mode<synchronous>, transform_indices = @transform_3, window_bounds = array<i64: 8, 256>}, {pipeline_mode = #tpu.pipeline_mode<synchronous>, transform_indices = @transform_4, window_bounds = array<i64: 1, 256>}, {pipeline_mode = #tpu.pipeline_mode<synchronous>, transform_indices = @transform_5, window_bounds = array<i64: 256, 256>}, {pipeline_mode = #tpu.pipeline_mode<synchronous>, transform_indices = @transform_6, window_bounds = array<i64: 1, 256>}, {pipeline_mode = #tpu.pipeline_mode<synchronous>, transform_indices = @transform_7, window_bounds = array<i64: 1, 256>}, {transform_indices = @transform_8, window_bounds = array<i64: 1, 1>}, {transform_indices = @transform_9, window_bounds = array<i64: 8, 1>}]} {
    %c0 = arith.constant 0 : index
    %c0_0 = arith.constant 0 : index
    %0 = vector.load %arg1[%c0, %c0_0] : memref<8x16xf32, #tpu.memory_space<vmem>>, vector<8x16xf32>
    %1 = arith.truncf %0 : vector<8x16xf32> to vector<8x16xbf16>
    %c0_1 = arith.constant 0 : index
    %c0_2 = arith.constant 0 : index
    %2 = vector.load %arg2[%c0_1, %c0_2] : memref<8x8xf32, #tpu.memory_space<vmem>>, vector<8x8xf32>
    %3 = arith.truncf %2 : vector<8x8xf32> to vector<8x8xbf16>
    %c0_3 = arith.constant 0 : index
    %c0_4 = arith.constant 0 : index
    %4 = vector.load %arg3[%c0_3, %c0_4] : memref<16x256xbf16, #tpu.memory_space<vmem>>, vector<16x256xbf16>
    %cst = arith.constant dense<0.000000e+00> : vector<8x256xf32>
    %5 = tpu.matmul %1, %4, %cst {dimension_numbers = #tpu.dot_dimension_numbers<[1], [0], [0], [1], [0, 0, 1, 1], [], []>} : vector<8x16xbf16>, vector<16x256xbf16>, vector<8x256xf32> -> vector<8x256xf32>
    %c0_5 = arith.constant 0 : index
    %c0_6 = arith.constant 0 : index
    %6 = vector.load %arg4[%c0_5, %c0_6] : memref<8x256xbf16, #tpu.memory_space<vmem>>, vector<8x256xbf16>
    %cst_7 = arith.constant dense<0.000000e+00> : vector<8x256xf32>
    %7 = tpu.matmul %3, %6, %cst_7 {dimension_numbers = #tpu.dot_dimension_numbers<[1], [0], [0], [1], [0, 0, 1, 1], [], []>} : vector<8x8xbf16>, vector<8x256xbf16>, vector<8x256xf32> -> vector<8x256xf32>
    %8 = arith.addf %5, %7 : vector<8x256xf32>
    %c0_8 = arith.constant 0 : index
    %c0_9 = arith.constant 0 : index
    %9 = vector.load %arg5[%c0_8, %c0_9] : memref<1x256xf32, #tpu.memory_space<vmem>>, vector<1x256xf32>
    %10 = vector.broadcast %9 : vector<1x256xf32> to vector<8x256xf32>
    %11 = arith.addf %8, %10 : vector<8x256xf32>
    %cst_10 = arith.constant 0.000000e+00 : f32
    %12 = vector.broadcast %cst_10 : f32 to vector<8x256xf32>
    %13 = arith.maximumf %11, %12 : vector<8x256xf32>
    %14 = arith.truncf %13 : vector<8x256xf32> to vector<8x256xbf16>
    %c0_11 = arith.constant 0 : index
    %c0_12 = arith.constant 0 : index
    %15 = vector.load %arg6[%c0_11, %c0_12] : memref<256x256xbf16, #tpu.memory_space<vmem>>, vector<256x256xbf16>
    %cst_13 = arith.constant dense<0.000000e+00> : vector<8x256xf32>
    %16 = tpu.matmul %14, %15, %cst_13 {dimension_numbers = #tpu.dot_dimension_numbers<[1], [0], [0], [1], [0, 0, 1, 1], [], []>} : vector<8x256xbf16>, vector<256x256xbf16>, vector<8x256xf32> -> vector<8x256xf32>
    %c0_14 = arith.constant 0 : index
    %c0_15 = arith.constant 0 : index
    %17 = vector.load %arg7[%c0_14, %c0_15] : memref<1x256xf32, #tpu.memory_space<vmem>>, vector<1x256xf32>
    %18 = vector.broadcast %17 : vector<1x256xf32> to vector<8x256xf32>
    %19 = arith.addf %16, %18 : vector<8x256xf32>
    %cst_16 = arith.constant 0.000000e+00 : f32
    %20 = vector.broadcast %cst_16 : f32 to vector<8x256xf32>
    %21 = arith.maximumf %19, %20 : vector<8x256xf32>
    %c0_17 = arith.constant 0 : index
    %c0_18 = arith.constant 0 : index
    %22 = vector.load %arg8[%c0_17, %c0_18] : memref<1x256xf32, #tpu.memory_space<vmem>>, vector<1x256xf32>
    %23 = vector.broadcast %22 : vector<1x256xf32> to vector<8x256xf32>
    %24 = arith.mulf %21, %23 : vector<8x256xf32>
    %cst_19 = arith.constant dense<0.000000e+00> : vector<8xf32>
    %25 = vector.multi_reduction <add>, %24, %cst_19 [1] : vector<8x256xf32> to vector<8xf32>
    %26 = vector.shape_cast %25 : vector<8xf32> to vector<8x1xf32>
    %c0_20 = arith.constant 0 : index
    %c0_21 = arith.constant 0 : index
    %27 = memref.load %arg9[%c0_20, %c0_21] : memref<1x1xf32, #tpu.memory_space<smem>>
    %28 = vector.broadcast %27 : f32 to vector<8x1xf32>
    %29 = arith.addf %26, %28 : vector<8x1xf32>
    %c0_22 = arith.constant 0 : index
    %c0_23 = arith.constant 0 : index
    %30 = vector.load %arg10[%c0_22, %c0_23] : memref<8x1xf32, #tpu.memory_space<vmem>>, vector<8x1xf32>
    tpu.vector_store %arg10[%c0_22, %c0_23], %29 {strides = array<i32>} : memref<8x1xf32, #tpu.memory_space<vmem>>, vector<8x1xf32>,
    return
  }
  func.func @transform_0(%arg0: i32) -> (i32, i32) {
    %c0_i32 = arith.constant 0 : i32
    %c0_i32_0 = arith.constant 0 : i32
    return %arg0, %c0_i32 : i32, i32
  }
  func.func @transform_1(%arg0: i32) -> (i32, i32) {
    %c0_i32 = arith.constant 0 : i32
    %c0_i32_0 = arith.constant 0 : i32
    return %arg0, %c0_i32 : i32, i32
  }
  func.func @transform_2(%arg0: i32) -> (i32, i32) {
    %c0_i32 = arith.constant 0 : i32
    %c0_i32_0 = arith.constant 0 : i32
    %c0_i32_1 = arith.constant 0 : i32
    return %c0_i32, %c0_i32_0 : i32, i32
  }
  func.func @transform_3(%arg0: i32) -> (i32, i32) {
    %c0_i32 = arith.constant 0 : i32
    %c0_i32_0 = arith.constant 0 : i32
    %c0_i32_1 = arith.constant 0 : i32
    return %c0_i32, %c0_i32_0 : i32, i32
  }
  func.func @transform_4(%arg0: i32) -> (i32, i32) {
    %c0_i32 = arith.constant 0 : i32
    %c0_i32_0 = arith.constant 0 : i32
    %c0_i32_1 = arith.constant 0 : i32
    return %c0_i32, %c0_i32_0 : i32, i32
  }
  func.func @transform_5(%arg0: i32) -> (i32, i32) {
    %c0_i32 = arith.constant 0 : i32
    %c0_i32_0 = arith.constant 0 : i32
    %c0_i32_1 = arith.constant 0 : i32
    return %c0_i32, %c0_i32_0 : i32, i32
  }
  func.func @transform_6(%arg0: i32) -> (i32, i32) {
    %c0_i32 = arith.constant 0 : i32
    %c0_i32_0 = arith.constant 0 : i32
    %c0_i32_1 = arith.constant 0 : i32
    return %c0_i32, %c0_i32_0 : i32, i32
  }
  func.func @transform_7(%arg0: i32) -> (i32, i32) {
    %c0_i32 = arith.constant 0 : i32
    %c0_i32_0 = arith.constant 0 : i32
    %c0_i32_1 = arith.constant 0 : i32
    return %c0_i32, %c0_i32_0 : i32, i32
  }
  func.func @transform_8(%arg0: i32) -> (i32, i32) {
    %c0_i32 = arith.constant 0 : i32
    %c0_i32_0 = arith.constant 0 : i32
    %c0_i32_1 = arith.constant 0 : i32
    return %c0_i32, %c0_i32_0 : i32, i32
  }
  func.func @transform_9(%arg0: i32) -> (i32, i32) {
    %c0_i32 = arith.constant 0 : i32
    %c0_i32_0 = arith.constant 0 : i32
    return %arg0, %c0_i32 : i32, i32
  }
}

</mosaic_0001>

<llo_original>
// kernel: tpu_custom_call.1
$region0: #{tpu_custom_call.1}
  #allocation0 [shape = 'u32[]', space=smem, size = 0x4, offset = 0x4, fixed_abs, tag = 'smem constant byte address 0x4 - core index']
  #allocation1 [shape = 'u32[72,128]{1,0:T(1,128)}', space=vmem, size = 0x9000, scoped, tag = 'internal scratch']
  #allocation2 [shape = 'f32[1,1]{1,0:T(1,128)S(6)}', space=smem, size = 0x200, scoped, tag = 'scoped memory for tpu_custom_call.1']
  %s0 = inlined_call_operand.hbm [shape: f32[8,16], index: 0, kind: input, shape index: {}]
  %s1 = inlined_call_operand.hbm [shape: f32[8,8], index: 1, kind: input, shape index: {}]
  %s2 = inlined_call_operand.hbm [shape: bf16[16,256], index: 2, kind: input, shape index: {}]
  %s3 = inlined_call_operand.hbm [shape: bf16[8,256], index: 3, kind: input, shape index: {}]
  %s4 = inlined_call_operand.vmem [shape: f32[1,256], index: 4, kind: input, shape index: {}]
  %s5 = inlined_call_operand.hbm [shape: bf16[256,256], index: 5, kind: input, shape index: {}]
  %s6 = inlined_call_operand.vmem [shape: f32[1,256], index: 6, kind: input, shape index: {}]
  %s7 = inlined_call_operand.vmem [shape: f32[1,256], index: 7, kind: input, shape index: {}]
  %s8 = inlined_call_operand.<no memory space> [shape: f32[1,1], index: 8, kind: input, shape index: {}]
  %s9 = inlined_call_operand.vmem [shape: f32[8,1], index: 9, kind: output, shape index: {}]
  %s10 = sld [smem:[#allocation0]]
  $region66: #{tpu_custom_call.1} parent=0
    _
  %s12 = ssub.s32 1, %s10
  %s13 = scalar_select 0, %s12, %s10
  %14 = sst [smem:[#allocation2]] %s8
  $region1: #{tpu_custom_call.1} parent=0
    #allocation3 [shape = 'u8[4096]{0}', space=vmem, size = 0x1000, scoped, tag = 'input window, operand 0, single buffered']
    #allocation4 [shape = 's32[1]{0}', space=sflag, size = 0x4, scoped, tag = 'scoped memory for tpu_custom_call.1']
    #allocation5 [shape = 'u8[4096]{0}', space=vmem, size = 0x1000, scoped, tag = 'input window, operand 1, single buffered']
    #allocation6 [shape = 's32[1]{0}', space=sflag, size = 0x4, scoped, tag = 'scoped memory for tpu_custom_call.1']
    #allocation7 [shape = 'u8[8192]{0}', space=vmem, size = 0x2000, scoped, tag = 'input window, operand 2, single buffered']
    #allocation8 [shape = 'u8[4096]{0}', space=vmem, size = 0x1000, scoped, tag = 'input window, operand 3, single buffered']
    #allocation9 [shape = 's32[1]{0}', space=sflag, size = 0x4, scoped, tag = 'scoped memory for tpu_custom_call.1']
    #allocation10 [shape = 'u8[131072]{0}', space=vmem, size = 0x20000, scoped, tag = 'input window, operand 5, single buffered']
    %15 = vsyncpa [#allocation4], 0
    %16 = vsyncpa [#allocation6], 0
    %17 = vsyncpa [#allocation9], 0
    // Predicated region
    $region2: #{tpu_custom_call.1} parent=1 // pred_check
      _
    $region3: #{tpu_custom_call.1} parent=1 // pred_check_branch
      %19 = sbr.rel (0) target = $region5
    $region4: #{tpu_custom_call.1} parent=1 // pred_region
      %21 = vsyncadd [#allocation4], 0
      %s23 = sshll.u32 %s0, 4
      %s24 = int_to_ptr.hbm [resolvable:$true] %s23
      %s25 = sshll.u32 [#allocation3], 4
      %s26 = int_to_ptr.vmem [resolvable:$true] %s25
      %28 = dma.hbm_to_vmem [thread:$0]  %s24, 128, %s26, [#allocation4]
    $region5: #{tpu_custom_call.1} parent=1 // pred_fallthru
      _
    // Predicated region
    $region6: #{tpu_custom_call.1} parent=1 // pred_check
      _
    $region7: #{tpu_custom_call.1} parent=1 // pred_check_branch
      %30 = sbr.rel (0) target = $region9
    $region8: #{tpu_custom_call.1} parent=1 // pred_region
      %32 = vsyncadd [#allocation6], 0
      %s34 = sshll.u32 %s1, 4
      %s35 = int_to_ptr.hbm [resolvable:$true] %s34
      %s36 = sshll.u32 [#allocation5], 4
      %s37 = int_to_ptr.vmem [resolvable:$true] %s36
      %39 = dma.hbm_to_vmem [thread:$0]  %s35, 128, %s37, [#allocation6]
    $region9: #{tpu_custom_call.1} parent=1 // pred_fallthru
      _
    // Predicated region
    $region10: #{tpu_custom_call.1} parent=1 // pred_check
      _
    $region11: #{tpu_custom_call.1} parent=1 // pred_check_branch
      %41 = sbr.rel (0) target = $region13
    $region12: #{tpu_custom_call.1} parent=1 // pred_region
      %43 = vsyncadd [#allocation6], 0
      %s44 = sshll.u32 %s2, 4
      %s45 = int_to_ptr.hbm [resolvable:$true] %s44
      %s46 = sshll.u32 [#allocation7], 4
      %s47 = int_to_ptr.vmem [resolvable:$true] %s46
      %52 = dma.hbm_to_vmem [thread:$0]  %s45, 256, %s47, [#allocation6], 128, 128, 8
    $region13: #{tpu_custom_call.1} parent=1 // pred_fallthru
      _
    // Predicated region
    $region14: #{tpu_custom_call.1} parent=1 // pred_check
      _
    $region15: #{tpu_custom_call.1} parent=1 // pred_check_branch
      %54 = sbr.rel (0) target = $region17
    $region16: #{tpu_custom_call.1} parent=1 // pred_region
      %56 = vsyncadd [#allocation9], 0
      %s58 = sshll.u32 %s3, 4
      %s59 = int_to_ptr.hbm [resolvable:$true] %s58
      %s60 = sshll.u32 [#allocation8], 4
      %s61 = int_to_ptr.vmem [resolvable:$true] %s60
      %63 = dma.hbm_to_vmem [thread:$0]  %s59, 128, %s61, [#allocation9]
    $region17: #{tpu_custom_call.1} parent=1 // pred_fallthru
      _
    // Predicated region
    $region18: #{tpu_custom_call.1} parent=1 // pred_check
      _
    $region19: #{tpu_custom_call.1} parent=1 // pred_check_branch
      %65 = sbr.rel (0) target = $region21
    $region20: #{tpu_custom_call.1} parent=1 // pred_region
      _
    $region21: #{tpu_custom_call.1} parent=1 // pred_fallthru
      _
    // Predicated region
    $region22: #{tpu_custom_call.1} parent=1 // pred_check
      _
    $region23: #{tpu_custom_call.1} parent=1 // pred_check_branch
      %67 = sbr.rel (0) target = $region25
    $region24: #{tpu_custom_call.1} parent=1 // pred_region
      %69 = vsyncadd [#allocation9], 0
      %s70 = sshll.u32 %s5, 4
      %s71 = int_to_ptr.hbm [resolvable:$true] %s70
      %s72 = sshll.u32 [#allocation10], 4
      %s73 = int_to_ptr.vmem [resolvable:$true] %s72
      %78 = dma.hbm_to_vmem [thread:$0]  %s71, 4096, %s73, [#allocation9], 128, 128, 8
    $region25: #{tpu_custom_call.1} parent=1 // pred_fallthru
      _
    // Predicated region
    $region26: #{tpu_custom_call.1} parent=1 // pred_check
      _
    $region27: #{tpu_custom_call.1} parent=1 // pred_check_branch
      %80 = sbr.rel (0) target = $region29
    $region28: #{tpu_custom_call.1} parent=1 // pred_region
      _
    $region29: #{tpu_custom_call.1} parent=1 // pred_fallthru
      _
    // Predicated region
    $region30: #{tpu_custom_call.1} parent=1 // pred_check
      _
    $region31: #{tpu_custom_call.1} parent=1 // pred_check_branch
      %82 = sbr.rel (0) target = $region33
    $region32: #{tpu_custom_call.1} parent=1 // pred_region
      _
    $region33: #{tpu_custom_call.1} parent=1 // pred_fallthru
      _
    // Predicated region
    $region34: #{tpu_custom_call.1} parent=1 // pred_check
      _
    $region35: #{tpu_custom_call.1} parent=1 // pred_check_branch
      %84 = sbr.rel (0) target = $region37
    $region36: #{tpu_custom_call.1} parent=1 // pred_region
      _
    $region37: #{tpu_custom_call.1} parent=1 // pred_fallthru
      _
    // Predicated region
    $region38: #{tpu_custom_call.1} parent=1 // pred_check
      _
    $region39: #{tpu_custom_call.1} parent=1 // pred_check_branch
      %86 = sbr.rel (0) target = $region41
    $region40: #{tpu_custom_call.1} parent=1 // pred_region
      %88 = dma.done [#allocation4], 128
    $region41: #{tpu_custom_call.1} parent=1 // pred_fallthru
      _
    // Predicated region
    $region42: #{tpu_custom_call.1} parent=1 // pred_check
      _
    $region43: #{tpu_custom_call.1} parent=1 // pred_check_branch
      %90 = sbr.rel (0) target = $region45
    $region44: #{tpu_custom_call.1} parent=1 // pred_region
      %92 = dma.done [#allocation6], 128
    $region45: #{tpu_custom_call.1} parent=1 // pred_fallthru
      _
    // Predicated region
    $region46: #{tpu_custom_call.1} parent=1 // pred_check
      _
    $region47: #{tpu_custom_call.1} parent=1 // pred_check_branch
      %94 = sbr.rel (0) target = $region49
    $region48: #{tpu_custom_call.1} parent=1 // pred_region
      %96 = dma.done [#allocation6], 256
    $region49: #{tpu_custom_call.1} parent=1 // pred_fallthru
      _
    // Predicated region
    $region50: #{tpu_custom_call.1} parent=1 // pred_check
      _
    $region51: #{tpu_custom_call.1} parent=1 // pred_check_branch
      %98 = sbr.rel (0) target = $region53
    $region52: #{tpu_custom_call.1} parent=1 // pred_region
      %100 = dma.done [#allocation9], 128
    $region53: #{tpu_custom_call.1} parent=1 // pred_fallthru
      _
    // Predicated region
    $region54: #{tpu_custom_call.1} parent=1 // pred_check
      _
    $region55: #{tpu_custom_call.1} parent=1 // pred_check_branch
      %102 = sbr.rel (0) target = $region57
    $region56: #{tpu_custom_call.1} parent=1 // pred_region
      %104 = dma.done [#allocation9], 4096
    $region57: #{tpu_custom_call.1} parent=1 // pred_fallthru
      _
    %v106 = vld [vmem:[#allocation3] sm:$0xff]
    %v107 = vpack.c.bf16 %v106, %v106
    %v108 = vld [vmem:[#allocation5] sm:$0xff]
    %v109 = vpack.c.bf16 %v108, %v108
    %v110 = vld [vmem:[#allocation7] sm:$0xff]
    %v111 = vld [vmem:[#allocation7 + $0x8] sm:$0xff]
    %v112 = vld [vmem:[#allocation8] sm:$0xff]
    %v114 = vunpack.c.l.b16 %v112
    %v115 = vunpack.c.h.b16 %v112
    %v116 = vpack.c.b16 %v114, %v114
    %v117 = vpack.c.b16 %v115, %v115
    %vm118 = vcmask 64512
    %v120 = vsel %vm118, %v109, 0
    %vm122 = vcmask 1043456
    %v124 = vsel %vm122, %v116, 0
    %v127 = vsel %vm122, %v117, 0
    %129 = vmatpush.bf16.msra.mxu0 0
    %130 = vmatpush.bf16.msra.mxu0 0
    %131 = vmatpush.bf16.msra.mxu0 0
    %132 = vmatpush.bf16.msra.mxu0 0
    %133 = vmatpush.bf16.msra.mxu0 0
    %134 = vmatpush.bf16.msra.mxu0 0
    %135 = vmatpush.bf16.msra.mxu0 0
    %136 = vmatpush.bf16.msra.mxu0 %v124
    %137 = vmatmul.bf16.gmra.mxu0 %v120
    %v138 = vpop.f32.mrf.mxu0
    %v139 = vadd.f32 0.0, %v138
    %v140 = vpop.f32.mrf.mxu0
    %141 = vdwg.mxu0
    %142 = vmatpush.bf16.msra.mxu0 0
    %143 = vmatpush.bf16.msra.mxu0 0
    %144 = vmatpush.bf16.msra.mxu0 0
    %145 = vmatpush.bf16.msra.mxu0 0
    %146 = vmatpush.bf16.msra.mxu0 0
    %147 = vmatpush.bf16.msra.mxu0 0
    %148 = vmatpush.bf16.msra.mxu0 0
    %149 = vmatpush.bf16.msra.mxu0 %v127
    %150 = vmatmul.bf16.gmra.mxu0 %v120
    %v151 = vpop.f32.mrf.mxu0
    %v152 = vadd.f32 0.0, %v151
    %v153 = vpop.f32.mrf.mxu0
    %154 = vdwg.mxu0
    %v157 = vunpack.c.l.b16 %v110
    %v158 = vunpack.c.h.b16 %v110
    %v159 = vunpack.c.l.b16 %v111
    %v160 = vunpack.c.h.b16 %v111
    %v161 = vpack.c.b16 %v159, %v157
    %v162 = vpack.c.b16 %v160, %v158
    %vm165 = vcmask 130048
    %v167 = vsel %vm165, %v107, 0
    %169 = vmatpush.bf16.msra.mxu0 0
    %170 = vmatpush.bf16.msra.mxu0 0
    %171 = vmatpush.bf16.msra.mxu0 0
    %172 = vmatpush.bf16.msra.mxu0 0
    %173 = vmatpush.bf16.msra.mxu0 0
    %174 = vmatpush.bf16.msra.mxu0 0
    %175 = vmatpush.bf16.msra.mxu0 0
    %176 = vmatpush.bf16.msra.mxu0 %v161
    %177 = vmatmul.bf16.gmra.mxu0 %v167
    %v178 = vpop.f32.mrf.mxu0
    %v179 = vadd.f32 %v139, %v178
    %v180 = vpop.f32.mrf.mxu0
    %181 = vdwg.mxu0
    %182 = vmatpush.bf16.msra.mxu0 0
    %183 = vmatpush.bf16.msra.mxu0 0
    %184 = vmatpush.bf16.msra.mxu0 0
    %185 = vmatpush.bf16.msra.mxu0 0
    %186 = vmatpush.bf16.msra.mxu0 0
    %187 = vmatpush.bf16.msra.mxu0 0
    %188 = vmatpush.bf16.msra.mxu0 0
    %189 = vmatpush.bf16.msra.mxu0 %v162
    %190 = vmatmul.bf16.gmra.mxu0 %v167
    %v191 = vpop.f32.mrf.mxu0
    %v192 = vadd.f32 %v152, %v191
    %v193 = vpop.f32.mrf.mxu0
    %194 = vdwg.mxu0
    %v195 = vld [vmem:[%s4] sm:$0x3]
    %v197 = vperm.slane %v195, 0
    %v198 = vperm.slane %v195, 1
    %v201 = vadd.f32 %v179, %v197
    %v202 = vadd.f32 %v192, %v198
    %v203 = vmax.f32 %v201, 0.0
    %v204 = vmax.f32 %v202, 0.0
    %v205 = vpack.c.bf16 %v203, %v203
    %v206 = vpack.c.bf16 %v204, %v204
    %v207 = vld [vmem:[#allocation10] sm:$0xff]
    %v208 = vld [vmem:[#allocation10 + $0x8] sm:$0xff]
    %v209 = vld [vmem:[#allocation10 + $0x10] sm:$0xff]
    %v210 = vld [vmem:[#allocation10 + $0x18] sm:$0xff]
    %v211 = vld [vmem:[#allocation10 + $0x20] sm:$0xff]
    %v212 = vld [vmem:[#allocation10 + $0x28] sm:$0xff]
    %v213 = vld [vmem:[#allocation10 + $0x30] sm:$0xff]
    %v214 = vld [vmem:[#allocation10 + $0x38] sm:$0xff]
    %v215 = vld [vmem:[#allocation10 + $0x40] sm:$0xff]
    %v216 = vld [vmem:[#allocation10 + $0x48] sm:$0xff]
    %v217 = vld [vmem:[#allocation10 + $0x50] sm:$0xff]
    %v218 = vld [vmem:[#allocation10 + $0x58] sm:$0xff]
    %v219 = vld [vmem:[#allocation10 + $0x60] sm:$0xff]
    %v220 = vld [vmem:[#allocation10 + $0x68] sm:$0xff]
    %v221 = vld [vmem:[#allocation10 + $0x70] sm:$0xff]
    %v222 = vld [vmem:[#allocation10 + $0x78] sm:$0xff]
    %v223 = vld [vmem:[#allocation10 + $0x80] sm:$0xff]
    %v224 = vld [vmem:[#allocation10 + $0x88] sm:$0xff]
    %v225 = vld [vmem:[#allocation10 + $0x90] sm:$0xff]
    %v226 = vld [vmem:[#allocation10 + $0x98] sm:$0xff]
    %v227 = vld [vmem:[#allocation10 + $0xa0] sm:$0xff]
    %v228 = vld [vmem:[#allocation10 + $0xa8] sm:$0xff]
    %v229 = vld [vmem:[#allocation10 + $0xb0] sm:$0xff]
    %v230 = vld [vmem:[#allocation10 + $0xb8] sm:$0xff]
    %v231 = vld [vmem:[#allocation10 + $0xc0] sm:$0xff]
    %v232 = vld [vmem:[#allocation10 + $0xc8] sm:$0xff]
    %v233 = vld [vmem:[#allocation10 + $0xd0] sm:$0xff]
    %v234 = vld [vmem:[#allocation10 + $0xd8] sm:$0xff]
    %v235 = vld [vmem:[#allocation10 + $0xe0] sm:$0xff]
    %v236 = vld [vmem:[#allocation10 + $0xe8] sm:$0xff]
    %v237 = vld [vmem:[#allocation10 + $0xf0] sm:$0xff]
    %v238 = vld [vmem:[#allocation10 + $0xf8] sm:$0xff]
    %v239 = vld [vmem:[%s6] sm:$0x3]
    %v241 = vperm.slane %v239, 0
    %v242 = vperm.slane %v239, 1
    %v277 = vunpack.c.l.b16 %v207
    %v278 = vunpack.c.h.b16 %v207
    %v279 = vunpack.c.l.b16 %v208
    %v280 = vunpack.c.h.b16 %v208
    %v281 = vunpack.c.l.b16 %v209
    %v282 = vunpack.c.h.b16 %v209
    %v283 = vunpack.c.l.b16 %v210
    %v284 = vunpack.c.h.b16 %v210
    %v285 = vunpack.c.l.b16 %v211
    %v286 = vunpack.c.h.b16 %v211
    %v287 = vunpack.c.l.b16 %v212
    %v288 = vunpack.c.h.b16 %v212
    %v289 = vunpack.c.l.b16 %v213
    %v290 = vunpack.c.h.b16 %v213
    %v291 = vunpack.c.l.b16 %v214
    %v292 = vunpack.c.h.b16 %v214
    %v293 = vunpack.c.l.b16 %v215
    %v294 = vunpack.c.h.b16 %v215
    %v295 = vunpack.c.l.b16 %v216
    %v296 = vunpack.c.h.b16 %v216
    %v297 = vunpack.c.l.b16 %v217
    %v298 = vunpack.c.h.b16 %v217
    %v299 = vunpack.c.l.b16 %v218
    %v300 = vunpack.c.h.b16 %v218
    %v301 = vunpack.c.l.b16 %v219
    %v302 = vunpack.c.h.b16 %v219
    %v303 = vunpack.c.l.b16 %v220
    %v304 = vunpack.c.h.b16 %v220
    %v305 = vunpack.c.l.b16 %v221
    %v306 = vunpack.c.h.b16 %v221
    %v307 = vunpack.c.l.b16 %v222
    %v308 = vunpack.c.h.b16 %v222
    %v309 = vunpack.c.l.b16 %v223
    %v310 = vunpack.c.h.b16 %v223
    %v311 = vunpack.c.l.b16 %v224
    %v312 = vunpack.c.h.b16 %v224
    %v313 = vunpack.c.l.b16 %v225
    %v314 = vunpack.c.h.b16 %v225
    %v315 = vunpack.c.l.b16 %v226
    %v316 = vunpack.c.h.b16 %v226
    %v317 = vunpack.c.l.b16 %v227
    %v318 = vunpack.c.h.b16 %v227
    %v319 = vunpack.c.l.b16 %v228
    %v320 = vunpack.c.h.b16 %v228
    %v321 = vunpack.c.l.b16 %v229
    %v322 = vunpack.c.h.b16 %v229
    %v323 = vunpack.c.l.b16 %v230
    %v324 = vunpack.c.h.b16 %v230
    %v325 = vunpack.c.l.b16 %v231
    %v326 = vunpack.c.h.b16 %v231
    %v327 = vunpack.c.l.b16 %v232
    %v328 = vunpack.c.h.b16 %v232
    %v329 = vunpack.c.l.b16 %v233
    %v330 = vunpack.c.h.b16 %v233
    %v331 = vunpack.c.l.b16 %v234
    %v332 = vunpack.c.h.b16 %v234
    %v333 = vunpack.c.l.b16 %v235
    %v334 = vunpack.c.h.b16 %v235
    %v335 = vunpack.c.l.b16 %v236
    %v336 = vunpack.c.h.b16 %v236
    %v337 = vunpack.c.l.b16 %v237
    %v338 = vunpack.c.h.b16 %v237
    %v339 = vunpack.c.l.b16 %v238
    %v340 = vunpack.c.h.b16 %v238
    %v341 = vpack.c.b16 %v279, %v277
    %v342 = vpack.c.b16 %v280, %v278
    %v343 = vpack.c.b16 %v283, %v281
    %v344 = vpack.c.b16 %v284, %v282
    %v345 = vpack.c.b16 %v287, %v285
    %v346 = vpack.c.b16 %v288, %v286
    %v347 = vpack.c.b16 %v291, %v289
    %v348 = vpack.c.b16 %v292, %v290
    %v349 = vpack.c.b16 %v295, %v293
    %v350 = vpack.c.b16 %v296, %v294
    %v351 = vpack.c.b16 %v299, %v297
    %v352 = vpack.c.b16 %v300, %v298
    %v353 = vpack.c.b16 %v303, %v301
    %v354 = vpack.c.b16 %v304, %v302
    %v355 = vpack.c.b16 %v307, %v305
    %v356 = vpack.c.b16 %v308, %v306
    %v357 = vpack.c.b16 %v311, %v309
    %v358 = vpack.c.b16 %v312, %v310
    %v359 = vpack.c.b16 %v315, %v313
    %v360 = vpack.c.b16 %v316, %v314
    %v361 = vpack.c.b16 %v319, %v317
    %v362 = vpack.c.b16 %v320, %v318
    %v363 = vpack.c.b16 %v323, %v321
    %v364 = vpack.c.b16 %v324, %v322
    %v365 = vpack.c.b16 %v327, %v325
    %v366 = vpack.c.b16 %v328, %v326
    %v367 = vpack.c.b16 %v331, %v329
    %v368 = vpack.c.b16 %v332, %v330
    %v369 = vpack.c.b16 %v335, %v333
    %v370 = vpack.c.b16 %v336, %v334
    %v371 = vpack.c.b16 %v339, %v337
    %v372 = vpack.c.b16 %v340, %v338
    %405 = vmatpush.bf16.msra.mxu0 %v355
    %406 = vmatpush.bf16.msra.mxu0 %v353
    %407 = vmatpush.bf16.msra.mxu0 %v351
    %408 = vmatpush.bf16.msra.mxu0 %v349
    %409 = vmatpush.bf16.msra.mxu0 %v347
    %410 = vmatpush.bf16.msra.mxu0 %v345
    %411 = vmatpush.bf16.msra.mxu0 %v343
    %412 = vmatpush.bf16.msra.mxu0 %v341
    %413 = vmatmul.bf16.gmra.mxu0 %v205
    %v414 = vpop.f32.mrf.mxu0
    %v415 = vadd.f32 %v241, %v414
    %v416 = vpop.f32.mrf.mxu0
    %417 = vdwg.mxu0
    %418 = vmatpush.bf16.msra.mxu0 %v371
    %419 = vmatpush.bf16.msra.mxu0 %v369
    %420 = vmatpush.bf16.msra.mxu0 %v367
    %421 = vmatpush.bf16.msra.mxu0 %v365
    %422 = vmatpush.bf16.msra.mxu0 %v363
    %423 = vmatpush.bf16.msra.mxu0 %v361
    %424 = vmatpush.bf16.msra.mxu0 %v359
    %425 = vmatpush.bf16.msra.mxu0 %v357
    %426 = vmatmul.bf16.gmra.mxu0 %v206
    %v427 = vpop.f32.mrf.mxu0
    %v428 = vadd.f32 %v415, %v427
    %v429 = vpop.f32.mrf.mxu0
    %430 = vdwg.mxu0
    %431 = vmatpush.bf16.msra.mxu0 %v356
    %432 = vmatpush.bf16.msra.mxu0 %v354
    %433 = vmatpush.bf16.msra.mxu0 %v352
    %434 = vmatpush.bf16.msra.mxu0 %v350
    %435 = vmatpush.bf16.msra.mxu0 %v348
    %436 = vmatpush.bf16.msra.mxu0 %v346
    %437 = vmatpush.bf16.msra.mxu0 %v344
    %438 = vmatpush.bf16.msra.mxu0 %v342
    %439 = vmatmul.bf16.gmra.mxu0 %v205
    %v440 = vpop.f32.mrf.mxu0
    %v441 = vadd.f32 %v242, %v440
    %v442 = vpop.f32.mrf.mxu0
    %443 = vdwg.mxu0
    %444 = vmatpush.bf16.msra.mxu0 %v372
    %445 = vmatpush.bf16.msra.mxu0 %v370
    %446 = vmatpush.bf16.msra.mxu0 %v368
    %447 = vmatpush.bf16.msra.mxu0 %v366
    %448 = vmatpush.bf16.msra.mxu0 %v364
    %449 = vmatpush.bf16.msra.mxu0 %v362
    %450 = vmatpush.bf16.msra.mxu0 %v360
    %451 = vmatpush.bf16.msra.mxu0 %v358
    %452 = vmatmul.bf16.gmra.mxu0 %v206
    %v453 = vpop.f32.mrf.mxu0
    %v454 = vadd.f32 %v441, %v453
    %v455 = vpop.f32.mrf.mxu0
    %456 = vdwg.mxu0
    %v457 = vmax.f32 %v428, 0.0
    %v458 = vmax.f32 %v454, 0.0
    %v459 = vld [vmem:[%s7] sm:$0x3]
    %v461 = vperm.slane %v459, 0
    %v462 = vperm.slane %v459, 1
    %v465 = vmul.f32 %v457, %v461
    %v466 = vmul.f32 %v458, %v462
    %v467 = vadd.f32 %v465, %v466
    %468 = vadd.xlane.f32.xlu0 %v467
    %v469 = vpop.xlane.xlu0 %468
    %s470 = sld [smem:[#allocation2]]
    %v471 = vstv %s470
    %v472 = vadd.f32 %v469, %v471
    %vm473 = vcmask 7168
    %474 = vst.msk [vmem:[%s9] sm:$0xff] %vm473, %v472
    // Predicated region
    $region58: #{tpu_custom_call.1} parent=1 // pred_check
      _
    $region59: #{tpu_custom_call.1} parent=1 // pred_check_branch
      %476 = sbr.rel (0) target = $region61
    $region60: #{tpu_custom_call.1} parent=1 // pred_region
      _
    $region61: #{tpu_custom_call.1} parent=1 // pred_fallthru
      _
    // Predicated region
    $region62: #{tpu_custom_call.1} parent=1 // pred_check
      _
    $region63: #{tpu_custom_call.1} parent=1 // pred_check_branch
      %478 = sbr.rel (0) target = $region65
    $region64: #{tpu_custom_call.1} parent=1 // pred_region
      _
    $region65: #{tpu_custom_call.1} parent=1 // pred_fallthru
      _
    %479 = vsyncpa [#allocation4], 1
    %480 = vsyncpa [#allocation6], 1
    %481 = vsyncpa [#allocation9], 1

</llo_original>
